<compile_context>
chip_gen: v7x
topology: tpu7x:2x2x1
jax: 0.10.0
libtpu: 0.0.40
codegen_flags: <defaults>
</compile_context>

<pallas_src>
import functools

import jax
import jax.numpy as jnp
import numpy as np
from jax import lax
from jax.experimental import pallas as pl
from jax.experimental.pallas import tpu as pltpu

BN_EPS = 1e-5
_VMEM_LIMIT = 32 * 1024 * 1024   # safe scoped-VMEM budget on v5e / v6e / v7x

# Exact-f32 matmuls for the tiny parameter fold and the reference.
_dot = functools.partial(jnp.dot, precision=lax.Precision.HIGHEST)


def _round_up(x, m):
    return ((x + m - 1) // m) * m


def _pick_tile(requested, hw):
    """Lane-aligned pixel tile, clamped to the (padded) per-image spatial size."""
    cap = max(128, _round_up(hw, 128))
    return max(128, min(_round_up(requested, 128), cap))


# ---------------------------------------------------------------------------
# Pass 1: per-channel first/second moments of x over all N*H*W pixels.
#   sx  = sum_p x[:, p]            (Cin, 1)
#   sxx = sum_p x[:, p] x[:, p]^T  (Cin, Cin)
# Accumulated directly into the (grid-resident) output blocks.  The x@x.T is
# done as Cin unrolled broadcast-multiply + lane-reduce ops (pure VPU/XLU),
# avoiding any MXU pass / in-kernel transpose.
# ---------------------------------------------------------------------------
def _moments_kernel(x_ref, sx_ref, sxx_ref, *, hw):
    n = pl.program_id(0)
    t = pl.program_id(1)

    @pl.when(jnp.logical_and(n == 0, t == 0))
    def _init():
        sx_ref[...] = jnp.zeros_like(sx_ref)
        sxx_ref[...] = jnp.zeros_like(sxx_ref)

    x = x_ref[...]                       # (Cin, mt) f32, pixels on lanes
    cin, mt = x.shape
    if hw % mt != 0:
        # Mask out-of-range pixels of the last (partial) tile of each image.
        col = lax.broadcasted_iota(jnp.int32, x.shape, 1) + t * mt
        x = jnp.where(col < hw, x, 0.0)

    sx_ref[...] += jnp.sum(x, axis=1, keepdims=True)
    cols = [jnp.sum(x * x[i:i + 1, :], axis=1, keepdims=True) for i in range(cin)]
    sxx_ref[...] += jnp.concatenate(cols, axis=1)


# ---------------------------------------------------------------------------
# Pass 2: out = W_eff @ x + b_eff, tiled over pixels (lane-dense output).
# Cin is tiny (4), so the "matmul" is an unrolled VPU multiply-accumulate:
# exact f32, no MXU precision concerns, comfortably hidden under the HBM
# writeback of the (Cout, mt) output block.
# ---------------------------------------------------------------------------
def _apply_kernel(x_ref, w_ref, b_ref, o_ref):
    x = x_ref[...]                       # (Cin, mt)
    w = w_ref[...]                       # (Cout, Cin)
    cin = x.shape[0]
    acc = w[:, 0:1] * x[0:1, :] + b_ref[...]
    for k in range(1, cin):
        acc = acc + w[:, k:k + 1] * x[k:k + 1, :]
    o_ref[...] = acc.astype(o_ref.dtype)


# ---------------------------------------------------------------------------
# Tiny exact-f32 epilogue: fold conv1x1 / BN1 / conv1x1 / BN2 / skip into
# (W_eff, b_eff) from the batch moments of x.  BN1's beta cancels exactly
# through BN2's batch-mean subtraction.
# ---------------------------------------------------------------------------
def _fold_params(sx, sxx, m, w_unify, w1, g1, w2, g2, b2):
    cout, cin = w_unify.shape[0], w_unify.shape[1]
    wu = w_unify.reshape(cout, cin).astype(jnp.float32)
    w1m = w1.reshape(cout, cout).astype(jnp.float32)
    w2m = w2.reshape(cout, cout).astype(jnp.float32)
    g1v = g1.astype(jnp.float32)
    g2v = g2.astype(jnp.float32)
    b2v = b2.astype(jnp.float32)

    mu_x = sx / m                                   # E[x]        (Cin, 1)
    exx = sxx / m                                   # E[x x^T]    (Cin, Cin)
    mu_f = _dot(wu, mu_x)                           # E[feats]    (Cout, 1)
    exx_f = _dot(_dot(wu, exx), wu.T)               # E[f f^T]    (Cout, Cout)
    cov_f = exx_f - _dot(mu_f, mu_f.T)              # Cov(feats)

    # BN1 over y1 = W1 @ feats  (batch mean/biased variance)
    var1 = jnp.maximum(jnp.sum(w1m * _dot(w1m, cov_f), axis=1), 0.0)
    s1 = g1v * lax.rsqrt(var1 + BN_EPS)
    # BN2 over y2 = W2 @ BN1(y1):  y2 - mean(y2) = B @ (feats - E[feats])
    bmat = _dot(w2m, s1[:, None] * w1m)             # (Cout, Cout)
    var2 = jnp.maximum(jnp.sum(bmat * _dot(bmat, cov_f), axis=1), 0.0)
    s2 = g2v * lax.rsqrt(var2 + BN_EPS)

    a2 = s2[:, None] * bmat
    weff = wu + _dot(a2, wu)                        # (I + A2) @ Wu
    beff = b2v[:, None] - s2[:, None] * _dot(bmat, mu_f)
    return weff, beff


def rrb_forward(x_nchw, w_unify, w1, g1, b1, w2, g2, b2, *,
                mt_moments=262144, mt_apply=65536, out_dtype=jnp.float32):
    """x_nchw: (N, Cin, H, W).  Conv weights PyTorch-shaped (Cout, Cin, 1, 1) /
    (Cout, Cout, 1, 1); BN params (Cout,).  Returns (N, Cout, H, W)."""
    N, Cin, H, W = x_nchw.shape
    Cout = w_unify.shape[0]
    HW = H * W
    M = N * HW
    del b1  # BN1's beta cancels exactly (BN2 subtracts the batch mean of y2).

    # Free view: pixels on the lane axis, no transpose.
    x3 = x_nchw.reshape(N, Cin, HW).astype(jnp.float32)

    mt1 = _pick_tile(mt_moments, HW)
    mt2 = _pick_tile(mt_apply, HW)
    t1 = pl.cdiv(HW, mt1)
    t2 = pl.cdiv(HW, mt2)

    # ---- Pass 1: moments (running accumulation across the whole grid).
    sx, sxx = pl.pallas_call(
        functools.partial(_moments_kernel, hw=HW),
        out_shape=(jax.ShapeDtypeStruct((Cin, 1), jnp.float32),
                   jax.ShapeDtypeStruct((Cin, Cin), jnp.float32)),
        grid=(N, t1),
        in_specs=[pl.BlockSpec((None, Cin, mt1), lambda n, t: (n, 0, t))],
        out_specs=(pl.BlockSpec((Cin, 1), lambda n, t: (0, 0)),
                   pl.BlockSpec((Cin, Cin), lambda n, t: (0, 0))),
        compiler_params=pltpu.CompilerParams(
            dimension_semantics=("arbitrary", "arbitrary"),
            vmem_limit_bytes=_VMEM_LIMIT),
    )(x3)

    # ---- Tiny exact epilogue: fold all parameters into one affine map.
    weff, beff = _fold_params(sx, sxx, float(M), w_unify, w1, g1, w2, g2, b2)

    # ---- Pass 2: fused affine application, fully parallel over (N, pixel tiles).
    out3 = pl.pallas_call(
        _apply_kernel,
        out_shape=jax.ShapeDtypeStruct((N, Cout, HW), out_dtype),
        grid=(N, t2),
        in_specs=[pl.BlockSpec((None, Cin, mt2), lambda n, t: (n, 0, t)),
                  pl.BlockSpec((Cout, Cin), lambda n, t: (0, 0)),
                  pl.BlockSpec((Cout, 1), lambda n, t: (0, 0))],
        out_specs=pl.BlockSpec((None, Cout, mt2), lambda n, t: (n, 0, t)),
        compiler_params=pltpu.CompilerParams(
            dimension_semantics=("parallel", "parallel"),
            vmem_limit_bytes=_VMEM_LIMIT),
    )(x3, weff, beff)

    # Free view back to NCHW (no transpose, no slice).
    return out3.reshape(N, Cout, H, W)


def _rrb_reference(x_nchw, w_unify, w1, g1, b1, w2, g2, b2):
    """Pure-JAX reference matching the PyTorch forward (training-mode BN)."""
    N, Cin, H, W = x_nchw.shape
    Cout = w_unify.shape[0]
    x2d = jnp.transpose(x_nchw, (0, 2, 3, 1)).reshape(-1, Cin).astype(jnp.float32)
    feats = _dot(x2d, w_unify.reshape(Cout, Cin).T)

    def bn(y, g, b):
        m = jnp.mean(y, axis=0, keepdims=True)
        v = jnp.mean((y - m) ** 2, axis=0, keepdims=True)
        return (y - m) / jnp.sqrt(v + BN_EPS) * g + b

    h1 = bn(_dot(feats, w1.reshape(Cout, Cout).T), g1, b1)
    h2 = bn(_dot(h1, w2.reshape(Cout, Cout).T), g2, b2)
    out = feats + h2
    return jnp.transpose(out.reshape(N, H, W, Cout), (0, 3, 1, 2))


if __name__ == "__main__":
    # Small shapes consistent with RRB(features=4, out_features=32).
    N, Cin, H, W = 2, 4, 16, 16
    Cout = 32

    key = jax.random.PRNGKey(0)
    kx, kwu, kw1, kw2, kg1, kb1, kg2, kb2 = jax.random.split(key, 8)

    x = jax.random.normal(kx, (N, Cin, H, W), dtype=jnp.float32)
    w_unify = jax.random.normal(kwu, (Cout, Cin, 1, 1), jnp.float32) * 0.1
    w1 = jax.random.normal(kw1, (Cout, Cout, 1, 1), jnp.float32) * 0.1
    w2 = jax.random.normal(kw2, (Cout, Cout, 1, 1), jnp.float32) * 0.1
    g1 = 1.0 + 0.1 * jax.random.normal(kg1, (Cout,), jnp.float32)
    b1 = 0.1 * jax.random.normal(kb1, (Cout,), jnp.float32)
    g2 = 1.0 + 0.1 * jax.random.normal(kg2, (Cout,), jnp.float32)
    b2 = 0.1 * jax.random.normal(kb2, (Cout,), jnp.float32)

    # Small tiles so the test exercises multi-tile moment accumulation and the
    # multi-tile parallel apply pass even at 16x16 spatial size.
    fwd = jax.jit(functools.partial(rrb_forward, mt_moments=128, mt_apply=128))
    out = jax.block_until_ready(fwd(x, w_unify, w1, g1, b1, w2, g2, b2))

    ref = _rrb_reference(x, w_unify, w1, g1, b1, w2, g2, b2)
    np.testing.assert_allclose(np.asarray(out), np.asarray(ref),
                               rtol=5e-4, atol=5e-4)
    assert out.shape == (N, Cout, H, W)

    print("KERNEL_OK")
</pallas_src>

<mosaic_0001>
module attributes {stable_mosaic.version = 11 : i64} {
  func.func @_moments_kernel(%arg0: i32, %arg1: i32, %arg2: memref<1x4x128xf32, #tpu.memory_space<vmem>>, %arg3: memref<4x1xf32, #tpu.memory_space<vmem>>, %arg4: memref<4x4xf32, #tpu.memory_space<vmem>>) attributes {dimension_semantics = [#tpu.dimension_semantics<arbitrary>, #tpu.dimension_semantics<arbitrary>], iteration_bounds = array<i64: 2, 2>, scalar_prefetch = 0 : i64, scratch_operands = 0 : i64, tpu.core_type = #tpu.core_type<tc>, window_params = [{transform_indices = @transform_0, window_bounds = array<i64: 1, 4, 128>}, {pipeline_mode = #tpu.pipeline_mode<synchronous>, transform_indices = @transform_1, window_bounds = array<i64: 4, 1>}, {pipeline_mode = #tpu.pipeline_mode<synchronous>, transform_indices = @transform_2, window_bounds = array<i64: 4, 4>}]} {
    %c0_i32 = arith.constant 0 : i32
    %0 = arith.cmpi eq, %arg0, %c0_i32 : i32
    %c0_i32_0 = arith.constant 0 : i32
    %1 = arith.cmpi eq, %arg1, %c0_i32_0 : i32
    %2 = arith.andi %0, %1 : i1
    %3 = arith.extui %2 : i1 to i32
    %c0_i32_1 = arith.constant 0 : i32
    %4 = arith.cmpi ne, %3, %c0_i32_1 : i32
    scf.if %4 {
      %cst_16 = arith.constant 0.000000e+00 : f32
      %36 = vector.broadcast %cst_16 : f32 to vector<4x1xf32>
      %c0_17 = arith.constant 0 : index
      %c0_18 = arith.constant 0 : index
      %37 = vector.load %arg3[%c0_17, %c0_18] : memref<4x1xf32, #tpu.memory_space<vmem>>, vector<4x1xf32>
      tpu.vector_store %arg3[%c0_17, %c0_18], %36 {strides = array<i32>} : memref<4x1xf32, #tpu.memory_space<vmem>>, vector<4x1xf32>,
      %cst_19 = arith.constant 0.000000e+00 : f32
      %38 = vector.broadcast %cst_19 : f32 to vector<4x4xf32>
      %c0_20 = arith.constant 0 : index
      %c0_21 = arith.constant 0 : index
      %39 = vector.load %arg4[%c0_20, %c0_21] : memref<4x4xf32, #tpu.memory_space<vmem>>, vector<4x4xf32>
      tpu.vector_store %arg4[%c0_20, %c0_21], %38 {strides = array<i32>} : memref<4x4xf32, #tpu.memory_space<vmem>>, vector<4x4xf32>,
    } else {
    }
    %c0 = arith.constant 0 : index
    %c0_2 = arith.constant 0 : index
    %c0_3 = arith.constant 0 : index
    %5 = vector.load %arg2[%c0, %c0_2, %c0_3] : memref<1x4x128xf32, #tpu.memory_space<vmem>>, vector<1x4x128xf32>
    %6 = vector.shape_cast %5 : vector<1x4x128xf32> to vector<4x128xf32>
    %c0_4 = arith.constant 0 : index
    %c0_5 = arith.constant 0 : index
    %7 = vector.load %arg3[%c0_4, %c0_5] : memref<4x1xf32, #tpu.memory_space<vmem>>, vector<4x1xf32>
    %cst = arith.constant dense<0.000000e+00> : vector<4xf32>
    %8 = vector.multi_reduction <add>, %6, %cst [1] : vector<4x128xf32> to vector<4xf32>
    %9 = vector.shape_cast %8 : vector<4xf32> to vector<4x1xf32>
    %10 = arith.addf %7, %9 : vector<4x1xf32>
    %c0_6 = arith.constant 0 : index
    %c0_7 = arith.constant 0 : index
    %11 = vector.load %arg3[%c0_6, %c0_7] : memref<4x1xf32, #tpu.memory_space<vmem>>, vector<4x1xf32>
    tpu.vector_store %arg3[%c0_6, %c0_7], %10 {strides = array<i32>} : memref<4x1xf32, #tpu.memory_space<vmem>>, vector<4x1xf32>,
    %12 = vector.extract_strided_slice %6 {offsets = [0, 0], sizes = [1, 128], strides = [1, 1]} : vector<4x128xf32> to vector<1x128xf32>
    %13 = vector.broadcast %12 : vector<1x128xf32> to vector<4x128xf32>
    %14 = arith.mulf %6, %13 : vector<4x128xf32>
    %cst_8 = arith.constant dense<0.000000e+00> : vector<4xf32>
    %15 = vector.multi_reduction <add>, %14, %cst_8 [1] : vector<4x128xf32> to vector<4xf32>
    %16 = vector.shape_cast %15 : vector<4xf32> to vector<4x1xf32>
    %17 = vector.extract_strided_slice %6 {offsets = [1, 0], sizes = [1, 128], strides = [1, 1]} : vector<4x128xf32> to vector<1x128xf32>
    %18 = vector.broadcast %17 : vector<1x128xf32> to vector<4x128xf32>
    %19 = arith.mulf %6, %18 : vector<4x128xf32>
    %cst_9 = arith.constant dense<0.000000e+00> : vector<4xf32>
    %20 = vector.multi_reduction <add>, %19, %cst_9 [1] : vector<4x128xf32> to vector<4xf32>
    %21 = vector.shape_cast %20 : vector<4xf32> to vector<4x1xf32>
    %22 = vector.extract_strided_slice %6 {offsets = [2, 0], sizes = [1, 128], strides = [1, 1]} : vector<4x128xf32> to vector<1x128xf32>
    %23 = vector.broadcast %22 : vector<1x128xf32> to vector<4x128xf32>
    %24 = arith.mulf %6, %23 : vector<4x128xf32>
    %cst_10 = arith.constant dense<0.000000e+00> : vector<4xf32>
    %25 = vector.multi_reduction <add>, %24, %cst_10 [1] : vector<4x128xf32> to vector<4xf32>
    %26 = vector.shape_cast %25 : vector<4xf32> to vector<4x1xf32>
    %27 = vector.extract_strided_slice %6 {offsets = [3, 0], sizes = [1, 128], strides = [1, 1]} : vector<4x128xf32> to vector<1x128xf32>
    %28 = vector.broadcast %27 : vector<1x128xf32> to vector<4x128xf32>
    %29 = arith.mulf %6, %28 : vector<4x128xf32>
    %cst_11 = arith.constant dense<0.000000e+00> : vector<4xf32>
    %30 = vector.multi_reduction <add>, %29, %cst_11 [1] : vector<4x128xf32> to vector<4xf32>
    %31 = vector.shape_cast %30 : vector<4xf32> to vector<4x1xf32>
    %c0_12 = arith.constant 0 : index
    %c0_13 = arith.constant 0 : index
    %32 = vector.load %arg4[%c0_12, %c0_13] : memref<4x4xf32, #tpu.memory_space<vmem>>, vector<4x4xf32>
    %33 = tpu.concatenate %16, %21, %26, %31 in 1 : vector<4x1xf32>, vector<4x1xf32>, vector<4x1xf32>, vector<4x1xf32> -> vector<4x4xf32>
    %34 = arith.addf %32, %33 : vector<4x4xf32>
    %c0_14 = arith.constant 0 : index
    %c0_15 = arith.constant 0 : index
    %35 = vector.load %arg4[%c0_14, %c0_15] : memref<4x4xf32, #tpu.memory_space<vmem>>, vector<4x4xf32>
    tpu.vector_store %arg4[%c0_14, %c0_15], %34 {strides = array<i32>} : memref<4x4xf32, #tpu.memory_space<vmem>>, vector<4x4xf32>,
    return
  }
  func.func @transform_0(%arg0: i32, %arg1: i32) -> (i32, i32, i32) {
    %c0_i32 = arith.constant 0 : i32
    %c0_i32_0 = arith.constant 0 : i32
    return %arg0, %c0_i32, %arg1 : i32, i32, i32
  }
  func.func @transform_1(%arg0: i32, %arg1: i32) -> (i32, i32) {
    %c0_i32 = arith.constant 0 : i32
    %c0_i32_0 = arith.constant 0 : i32
    %c0_i32_1 = arith.constant 0 : i32
    return %c0_i32, %c0_i32_0 : i32, i32
  }
  func.func @transform_2(%arg0: i32, %arg1: i32) -> (i32, i32) {
    %c0_i32 = arith.constant 0 : i32
    %c0_i32_0 = arith.constant 0 : i32
    %c0_i32_1 = arith.constant 0 : i32
    return %c0_i32, %c0_i32_0 : i32, i32
  }
}

module attributes {stable_mosaic.version = 11 : i64} {
  func.func @_apply_kernel(%arg0: i32, %arg1: i32, %arg2: memref<1x4x128xf32, #tpu.memory_space<vmem>>, %arg3: memref<32x4xf32, #tpu.memory_space<vmem>>, %arg4: memref<32x1xf32, #tpu.memory_space<vmem>>, %arg5: memref<1x32x128xf32, #tpu.memory_space<vmem>>) attributes {dimension_semantics = [#tpu.dimension_semantics<parallel>, #tpu.dimension_semantics<parallel>], iteration_bounds = array<i64: 2, 2>, scalar_prefetch = 0 : i64, scratch_operands = 0 : i64, tpu.core_type = #tpu.core_type<tc>, window_params = [{transform_indices = @transform_0, window_bounds = array<i64: 1, 4, 128>}, {pipeline_mode = #tpu.pipeline_mode<synchronous>, transform_indices = @transform_1, window_bounds = array<i64: 32, 4>}, {pipeline_mode = #tpu.pipeline_mode<synchronous>, transform_indices = @transform_2, window_bounds = array<i64: 32, 1>}, {transform_indices = @transform_3, window_bounds = array<i64: 1, 32, 128>}]} {
    %c0 = arith.constant 0 : index
    %c0_0 = arith.constant 0 : index
    %c0_1 = arith.constant 0 : index
    %0 = vector.load %arg2[%c0, %c0_0, %c0_1] : memref<1x4x128xf32, #tpu.memory_space<vmem>>, vector<1x4x128xf32>
    %1 = vector.shape_cast %0 : vector<1x4x128xf32> to vector<4x128xf32>
    %c0_2 = arith.constant 0 : index
    %c0_3 = arith.constant 0 : index
    %2 = vector.load %arg3[%c0_2, %c0_3] : memref<32x4xf32, #tpu.memory_space<vmem>>, vector<32x4xf32>
    %3 = vector.extract_strided_slice %2 {offsets = [0, 0], sizes = [32, 1], strides = [1, 1]} : vector<32x4xf32> to vector<32x1xf32>
    %4 = vector.extract_strided_slice %1 {offsets = [0, 0], sizes = [1, 128], strides = [1, 1]} : vector<4x128xf32> to vector<1x128xf32>
    %5 = vector.broadcast %3 : vector<32x1xf32> to vector<32x128xf32>
    %6 = vector.broadcast %4 : vector<1x128xf32> to vector<32x128xf32>
    %7 = arith.mulf %5, %6 : vector<32x128xf32>
    %c0_4 = arith.constant 0 : index
    %c0_5 = arith.constant 0 : index
    %8 = vector.load %arg4[%c0_4, %c0_5] : memref<32x1xf32, #tpu.memory_space<vmem>>, vector<32x1xf32>
    %9 = vector.broadcast %8 : vector<32x1xf32> to vector<32x128xf32>
    %10 = arith.addf %7, %9 : vector<32x128xf32>
    %11 = vector.extract_strided_slice %2 {offsets = [0, 1], sizes = [32, 1], strides = [1, 1]} : vector<32x4xf32> to vector<32x1xf32>
    %12 = vector.extract_strided_slice %1 {offsets = [1, 0], sizes = [1, 128], strides = [1, 1]} : vector<4x128xf32> to vector<1x128xf32>
    %13 = vector.broadcast %11 : vector<32x1xf32> to vector<32x128xf32>
    %14 = vector.broadcast %12 : vector<1x128xf32> to vector<32x128xf32>
    %15 = arith.mulf %13, %14 : vector<32x128xf32>
    %16 = arith.addf %10, %15 : vector<32x128xf32>
    %17 = vector.extract_strided_slice %2 {offsets = [0, 2], sizes = [32, 1], strides = [1, 1]} : vector<32x4xf32> to vector<32x1xf32>
    %18 = vector.extract_strided_slice %1 {offsets = [2, 0], sizes = [1, 128], strides = [1, 1]} : vector<4x128xf32> to vector<1x128xf32>
    %19 = vector.broadcast %17 : vector<32x1xf32> to vector<32x128xf32>
    %20 = vector.broadcast %18 : vector<1x128xf32> to vector<32x128xf32>
    %21 = arith.mulf %19, %20 : vector<32x128xf32>
    %22 = arith.addf %16, %21 : vector<32x128xf32>
    %23 = vector.extract_strided_slice %2 {offsets = [0, 3], sizes = [32, 1], strides = [1, 1]} : vector<32x4xf32> to vector<32x1xf32>
    %24 = vector.extract_strided_slice %1 {offsets = [3, 0], sizes = [1, 128], strides = [1, 1]} : vector<4x128xf32> to vector<1x128xf32>
    %25 = vector.broadcast %23 : vector<32x1xf32> to vector<32x128xf32>
    %26 = vector.broadcast %24 : vector<1x128xf32> to vector<32x128xf32>
    %27 = arith.mulf %25, %26 : vector<32x128xf32>
    %28 = arith.addf %22, %27 : vector<32x128xf32>
    %c0_6 = arith.constant 0 : index
    %c0_7 = arith.constant 0 : index
    %c0_8 = arith.constant 0 : index
    %29 = vector.load %arg5[%c0_6, %c0_7, %c0_8] : memref<1x32x128xf32, #tpu.memory_space<vmem>>, vector<1x32x128xf32>
    %30 = vector.shape_cast %29 : vector<1x32x128xf32> to vector<32x128xf32>
    %31 = vector.shape_cast %28 : vector<32x128xf32> to vector<1x32x128xf32>
    tpu.vector_store %arg5[%c0_6, %c0_7, %c0_8], %31 {strides = array<i32>} : memref<1x32x128xf32, #tpu.memory_space<vmem>>, vector<1x32x128xf32>,
    return
  }
  func.func @transform_0(%arg0: i32, %arg1: i32) -> (i32, i32, i32) {
    %c0_i32 = arith.constant 0 : i32
    %c0_i32_0 = arith.constant 0 : i32
    return %arg0, %c0_i32, %arg1 : i32, i32, i32
  }
  func.func @transform_1(%arg0: i32, %arg1: i32) -> (i32, i32) {
    %c0_i32 = arith.constant 0 : i32
    %c0_i32_0 = arith.constant 0 : i32
    %c0_i32_1 = arith.constant 0 : i32
    return %c0_i32, %c0_i32_0 : i32, i32
  }
  func.func @transform_2(%arg0: i32, %arg1: i32) -> (i32, i32) {
    %c0_i32 = arith.constant 0 : i32
    %c0_i32_0 = arith.constant 0 : i32
    %c0_i32_1 = arith.constant 0 : i32
    return %c0_i32, %c0_i32_0 : i32, i32
  }
  func.func @transform_3(%arg0: i32, %arg1: i32) -> (i32, i32, i32) {
    %c0_i32 = arith.constant 0 : i32
    %c0_i32_0 = arith.constant 0 : i32
    return %arg0, %c0_i32, %arg1 : i32, i32, i32
  }
}

</mosaic_0001>

<llo_original>
// kernel: rrb_forward.2
$region0: #{rrb_forward.2}
  #allocation0 [shape = 'u32[]', space=smem, size = 0x4, offset = 0x4, fixed_abs, tag = 'smem constant byte address 0x4 - core index']
  #allocation1 [shape = 'u32[144,128]{1,0:T(1,128)}', space=vmem, size = 0x12000, scoped, tag = 'internal scratch']
  %s0 = inlined_call_operand.vmem [shape: f32[2,4,256], index: 0, kind: input, shape index: {}]
  %s1 = inlined_call_operand.vmem [shape: f32[4,1], index: 1, kind: output, shape index: {0}]
  %s2 = inlined_call_operand.vmem [shape: f32[4,4], index: 2, kind: output, shape index: {1}]
  %3 = xla_tuple %s1, %s2
  %s4 = sld [smem:[#allocation0]]
  $region49: #{rrb_forward.2} parent=0
    _
  %s6 = ssub.s32 1, %s4
  %s7 = scalar_select 0, %s6, %s4
  loop: start=0, step=1, limit=6
  $region2: #{rrb_forward.2} parent=0 // loop_pre_header
    _
  $region3: #{rrb_forward.2} parent=0 // loop_header
    %s9 = sphi 0, %s13
    %p10 = scmp.ge.s32.totalorder %s9, 6
    %s16 = sphi 0, %s28
    %s17 = sphi 0, %s24
    %s18 = sphi 0, %s16
    %s19 = sphi 0, %s17
    %s20 = sphi 0, %s18
    %s21 = sphi 0, %s19
    %s33 = sphi 0, %s35
    %s36 = sphi 0, %s33
    %s37 = sphi 0, %s36
    %s53 = sphi 0, %s37
    %s57 = sphi 0, %s57
    %s59 = sphi 0, %s57
    %s60 = sphi 0, %s59
    %s74 = sphi 0, %s60
    %s78 = sphi 0, %s78
    %s80 = sphi 0, %s78
    %s81 = sphi 0, %s80
    %s95 = sphi 0, %s81
  $region4: #{rrb_forward.2} parent=0 // loop_header_branch
    %12 = sbr.rel (%p10) target = $region8
  $region5: #{rrb_forward.2} parent=0 // loop_body
    %s14 = ssub.s32 %s9, 1
    %s15 = ssub.s32 %s9, 2
    %s22 = sadd.s32 1, %s17
    %p23 = scmp.ge.s32.totalorder %s22, 2
    %s24 = scalar_select %p23, 0, %s22
    %s25 = sadd.s32 1, %s16
    %s26 = scalar_select %p23, %s25, %s16
    %p27 = scmp.ge.s32.totalorder %s26, 2
    %s28 = scalar_select %p27, 0, %s26
    %s29 = ssub.s32 %s16, %s28
    %s30 = ssub.s32 %s17, %s24
    %s31 = sor.u32 %s29, %s30
    %p32 = scmp.eq.s32.totalorder %s31, 0
    %s34 = sadd.s32 %s33, 1
    %s35 = scalar_select %p32, %s33, %s34
    %p38 = pneg %p32
    %p39 = scmp.eq.s32.totalorder %s9, 3
    %p40 = por %p38, %p39
    %p41 = scmp.ne.s32.totalorder %s33, %s36
    %p42 = scmp.eq.s32.totalorder %s9, 0
    %p43 = por %p41, %p42
    %p44 = scmp.ne.s32.totalorder %s33, %s36
    %p45 = scmp.eq.s32.totalorder %s14, 3
    %p46 = por %p44, %p45
    %p47 = scmp.ne.s32.totalorder %s36, %s37
    %p48 = scmp.eq.s32.totalorder %s14, 0
    %p49 = por %p47, %p48
    %p50 = scmp.ne.s32.totalorder %s36, %s37
    %p51 = scmp.eq.s32.totalorder %s15, 3
    %p52 = por %p50, %p51
    %p54 = scmp.ne.s32.totalorder %s37, %s53
    %p55 = scmp.eq.s32.totalorder %s15, 0
    %p56 = por %p54, %p55
    %s58 = sadd.s32 %s57, 1
    %p61 = scmp.eq.s32.totalorder %s9, 3
    %p62 = scmp.ne.s32.totalorder %s57, %s59
    %p63 = scmp.eq.s32.totalorder %s9, 0
    %p64 = por %p62, %p63
    %p65 = scmp.ne.s32.totalorder %s57, %s59
    %p66 = scmp.eq.s32.totalorder %s14, 3
    %p67 = por %p65, %p66
    %p68 = scmp.ne.s32.totalorder %s59, %s60
    %p69 = scmp.eq.s32.totalorder %s14, 0
    %p70 = por %p68, %p69
    %p71 = scmp.ne.s32.totalorder %s59, %s60
    %p72 = scmp.eq.s32.totalorder %s15, 3
    %p73 = por %p71, %p72
    %p75 = scmp.ne.s32.totalorder %s60, %s74
    %p76 = scmp.eq.s32.totalorder %s15, 0
    %p77 = por %p75, %p76
    %s79 = sadd.s32 %s78, 1
    %p82 = scmp.eq.s32.totalorder %s9, 3
    %p83 = scmp.ne.s32.totalorder %s78, %s80
    %p84 = scmp.eq.s32.totalorder %s9, 0
    %p85 = por %p83, %p84
    %p86 = scmp.ne.s32.totalorder %s78, %s80
    %p87 = scmp.eq.s32.totalorder %s14, 3
    %p88 = por %p86, %p87
    %p89 = scmp.ne.s32.totalorder %s80, %s81
    %p90 = scmp.eq.s32.totalorder %s14, 0
    %p91 = por %p89, %p90
    %p92 = scmp.ne.s32.totalorder %s80, %s81
    %p93 = scmp.eq.s32.totalorder %s15, 3
    %p94 = por %p92, %p93
    %p96 = scmp.ne.s32.totalorder %s81, %s95
    %p97 = scmp.eq.s32.totalorder %s15, 0
    %p98 = por %p96, %p97
    %p99 = scmp.le.s32.totalorder 1, %s9
    %p100 = scmp.lt.s32.totalorder %s9, 5
    %p101 = pnand %p99, %p100
    %p102 = pneg %p101
    // Predicated region
    $region9: #{rrb_forward.2} parent=5 // pred_check
      _
    $region10: #{rrb_forward.2} parent=5 // pred_check_branch
      %104 = sbr.rel (%p101) target = $region12
    $region11: #{rrb_forward.2} parent=5 // pred_region
      %s105 = ssub.s32 %s9, 1
    $region12: #{rrb_forward.2} parent=5 // pred_fallthru
      _
    %p106 = scmp.lt.s32.totalorder %s9, 4
    // Predicated region
    $region13: #{rrb_forward.2} parent=5 // pred_check
      %p107 = pneg %p106
    $region14: #{rrb_forward.2} parent=5 // pred_check_branch
      %109 = sbr.rel (%p107) target = $region16
    $region15: #{rrb_forward.2} parent=5 // pred_region
      // Predicated region
      $region17: #{rrb_forward.2} parent=15 // pred_check
        %p110 = pneg %p43
      $region18: #{rrb_forward.2} parent=15 // pred_check_branch
        %112 = sbr.rel (%p110) target = $region20
      $region19: #{rrb_forward.2} parent=15 // pred_region
        %p113 = scmp.lt.s32.totalorder %s16, 1
        %s114 = scalar_select %p113, %s16, 1
        %p115 = scmp.lt.s32.totalorder %s17, 1
        %s116 = scalar_select %p115, %s17, 1
        %s117 = smul.addr %s114, 2
        %s118 = sadd.s32 %s116, %s117
        %s119 = smul.addr %s118, 4
        %s120 = scalar_lea.vmem %s0, %s119
      $region20: #{rrb_forward.2} parent=15 // pred_fallthru
        _
    $region16: #{rrb_forward.2} parent=5 // pred_fallthru
      _
    %p121 = scmp.le.s32.totalorder 1, %s9
    %p122 = scmp.lt.s32.totalorder %s9, 5
    %p123 = pnand %p121, %p122
    %p124 = pneg %p123
    // Predicated region
    $region21: #{rrb_forward.2} parent=5 // pred_check
      _
    $region22: #{rrb_forward.2} parent=5 // pred_check_branch
      %126 = sbr.rel (%p123) target = $region24
    $region23: #{rrb_forward.2} parent=5 // pred_region
      %s127 = ssub.s32 %s9, 1
      %p128 = scmp.lt.s32.totalorder %s18, 1
      %s129 = scalar_select %p128, %s18, 1
      %p130 = scmp.lt.s32.totalorder %s19, 1
      %s131 = scalar_select %p130, %s19, 1
      %s132 = smul.addr %s129, 2
      %s133 = sadd.s32 %s131, %s132
      %s134 = smul.addr %s133, 4
      %s135 = scalar_lea.vmem %s0, %s134
      %p136 = pneg %p49
      %p137 = pneg %p46
      %p138 = pneg %p70
      %p139 = pneg %p67
      %p140 = pneg %p91
      %p141 = pneg %p88
      %p142 = scmp.lt.s32.totalorder %s18, 1
      %s143 = scalar_select %p142, %s18, 1
      %p144 = scmp.lt.s32.totalorder %s19, 1
      %s145 = scalar_select %p144, %s19, 1
      %s146 = smul.addr %s143, 2
      %s147 = sadd.s32 %s145, %s146
      %s148 = smul.addr %s147, 4
      %s149 = scalar_lea.vmem %s0, %s148
      %p150 = scmp.eq.s32.totalorder %s18, 0
      %p151 = scmp.eq.s32.totalorder %s19, 0
      %p152 = pnand %p150, %p151
      %p153 = pneg %p152
      // Predicated region
      $region25: #{rrb_forward.2} parent=23 // pred_check
        _
      $region26: #{rrb_forward.2} parent=23 // pred_check_branch
        %155 = sbr.rel (%p152) target = $region28
      $region27: #{rrb_forward.2} parent=23 // pred_region
        %vm156 = vcmask 3072
        %157 = vst.msk [vmem:[%s1] sm:$0xf] %vm156, 0.0
        %vm158 = vcmask 27648
        %159 = vst.msk [vmem:[%s2] sm:$0xf] %vm158, 0.0
      $region28: #{rrb_forward.2} parent=23 // pred_fallthru
        _
      %v160 = vld [vmem:[%s149] sm:$0xf]
      %v161 = vld [vmem:[%s1] sm:$0xf]
      %vm162 = vcmask 1043456
      %v163 = vsel %vm162, %v160, 0.0
      %164 = vadd.xlane.f32.xlu0 %v163
      %v165 = vpop.xlane.xlu0 %164
      %v166 = vadd.f32 %v161, %v165
      %vm167 = vcmask 3072
      %168 = vst.msk [vmem:[%s1] sm:$0xf] %vm167, %v166
      %v169 = vlaneseq
      %v170 = vshrl.u32 %v169, 7
      %v171 = vsub.s32 0, %v170
      %v172 = vrot.slane %v160, %v171
      %v173 = vmul.f32 %v160, %v172
      %v174 = vsel %vm162, %v173, 0.0
      %175 = vadd.xlane.f32.xlu0 %v174
      %v176 = vpop.xlane.xlu0 %175
      %v177 = vlaneseq
      %v178 = vshrl.u32 %v177, 7
      %v179 = vsub.s32 1, %v178
      %v180 = vrot.slane %v160, %v179
      %v181 = vmul.f32 %v160, %v180
      %v182 = vsel %vm162, %v181, 0.0
      %183 = vadd.xlane.f32.xlu0 %v182
      %v184 = vpop.xlane.xlu0 %183
      %v185 = vlaneseq
      %v186 = vshrl.u32 %v185, 7
      %v187 = vsub.s32 2, %v186
      %v188 = vrot.slane %v160, %v187
      %v189 = vmul.f32 %v160, %v188
      %v190 = vsel %vm162, %v189, 0.0
      %191 = vadd.xlane.f32.xlu0 %v190
      %v192 = vpop.xlane.xlu0 %191
      %v193 = vlaneseq
      %v194 = vshrl.u32 %v193, 7
      %v195 = vsub.s32 3, %v194
      %v196 = vrot.slane %v160, %v195
      %v197 = vmul.f32 %v160, %v196
      %v198 = vsel %vm162, %v197, 0.0
      %199 = vadd.xlane.f32.xlu0 %v198
      %v200 = vpop.xlane.xlu0 %199
      %v201 = vld [vmem:[%s2] sm:$0xf]
      %vm202 = vcmask 7168
      %v203 = vsel %vm202, %v176, %v184
      %vm204 = vcmask 15360
      %v205 = vsel %vm204, %v203, %v192
      %vm206 = vcmask 23552
      %v207 = vsel %vm206, %v205, %v200
      %v208 = vadd.f32 %v201, %v207
      %vm209 = vcmask 27648
      %210 = vst.msk [vmem:[%s2] sm:$0xf] %vm209, %v208
      // Predicated region
      $region29: #{rrb_forward.2} parent=23 // pred_check
        %p211 = pneg %p67
      $region30: #{rrb_forward.2} parent=23 // pred_check_branch
        %213 = sbr.rel (%p211) target = $region32
      $region31: #{rrb_forward.2} parent=23 // pred_region
        _
      $region32: #{rrb_forward.2} parent=23 // pred_fallthru
        _
      // Predicated region
      $region33: #{rrb_forward.2} parent=23 // pred_check
        %p214 = pneg %p88
      $region34: #{rrb_forward.2} parent=23 // pred_check_branch
        %216 = sbr.rel (%p214) target = $region36
      $region35: #{rrb_forward.2} parent=23 // pred_region
        _
      $region36: #{rrb_forward.2} parent=23 // pred_fallthru
        _
      // Predicated region
      $region37: #{rrb_forward.2} parent=23 // pred_check
        %p217 = pneg %p67
      $region38: #{rrb_forward.2} parent=23 // pred_check_branch
        %219 = sbr.rel (%p217) target = $region40
      $region39: #{rrb_forward.2} parent=23 // pred_region
        _
      $region40: #{rrb_forward.2} parent=23 // pred_fallthru
        _
      // Predicated region
      $region41: #{rrb_forward.2} parent=23 // pred_check
        %p220 = pneg %p88
      $region42: #{rrb_forward.2} parent=23 // pred_check_branch
        %222 = sbr.rel (%p220) target = $region44
      $region43: #{rrb_forward.2} parent=23 // pred_region
        _
      $region44: #{rrb_forward.2} parent=23 // pred_fallthru
        _
    $region24: #{rrb_forward.2} parent=5 // pred_fallthru
      _
    %p223 = scmp.le.s32.totalorder 2, %s9
    // Predicated region
    $region45: #{rrb_forward.2} parent=5 // pred_check
      %p224 = pneg %p223
    $region46: #{rrb_forward.2} parent=5 // pred_check_branch
      %226 = sbr.rel (%p224) target = $region48
    $region47: #{rrb_forward.2} parent=5 // pred_region
      %s227 = ssub.s32 %s9, 2
    $region48: #{rrb_forward.2} parent=5 // pred_fallthru
      _
  $region6: #{rrb_forward.2} parent=0 // loop_footer
    %s13 = sadd.s32 1, %s9
  $region7: #{rrb_forward.2} parent=0 // loop_footer_branch
    %8 = sbr.rel target = $region3
  $region8: #{rrb_forward.2} parent=0 // loop_exit
    _

// kernel: rrb_forward.3
$region0: #{rrb_forward.3}
  #allocation0 [shape = 'u32[]', space=smem, size = 0x4, offset = 0x4, fixed_abs, tag = 'smem constant byte address 0x4 - core index']
  #allocation1 [shape = 'u32[144,128]{1,0:T(1,128)}', space=vmem, size = 0x12000, scoped, tag = 'internal scratch']
  %s0 = inlined_call_operand.vmem [shape: f32[2,4,256], index: 0, kind: input, shape index: {}]
  %s1 = inlined_call_operand.vmem [shape: f32[32,4], index: 1, kind: input, shape index: {}]
  %s2 = inlined_call_operand.vmem [shape: f32[32,1], index: 2, kind: input, shape index: {}]
  %s3 = inlined_call_operand.vmem [shape: f32[2,32,256], index: 3, kind: output, shape index: {}]
  %s4 = sld [smem:[#allocation0]]
  $region79: #{rrb_forward.3} parent=0
    _
  %s6 = ssub.s32 1, %s4
  %s7 = scalar_select 0, %s6, %s4
  $region1: #{rrb_forward.3} parent=0
    #allocation2 [shape = 'u8[32768]{0}', space=vmem, size = 0x8000, scoped, tag = 'output window, operand 0']
    loop: start=0, step=1, limit=6
    $region2: #{rrb_forward.3} parent=1 // loop_pre_header
      _
    $region3: #{rrb_forward.3} parent=1 // loop_header
      %s9 = sphi 0, %s13
      %p10 = scmp.ge.s32.totalorder %s9, 6
      %s16 = sphi 0, %s28
      %s17 = sphi 0, %s24
      %s18 = sphi 0, %s16
      %s19 = sphi 0, %s17
      %s20 = sphi 0, %s18
      %s21 = sphi 0, %s19
      %s33 = sphi 0, %s35
      %s36 = sphi 0, %s33
      %s37 = sphi 0, %s36
      %s53 = sphi 0, %s37
      %s57 = sphi 0, %s57
      %s59 = sphi 0, %s57
      %s60 = sphi 0, %s59
      %s74 = sphi 0, %s60
      %s78 = sphi 0, %s78
      %s80 = sphi 0, %s78
      %s81 = sphi 0, %s80
      %s95 = sphi 0, %s81
      %s103 = sphi 0, %s105
      %s106 = sphi 0, %s103
      %s107 = sphi 0, %s106
      %s123 = sphi 0, %s107
    $region4: #{rrb_forward.3} parent=1 // loop_header_branch
      %12 = sbr.rel (%p10) target = $region8
    $region5: #{rrb_forward.3} parent=1 // loop_body
      %s14 = ssub.s32 %s9, 1
      %s15 = ssub.s32 %s9, 2
      %s22 = sadd.s32 1, %s17
      %p23 = scmp.ge.s32.totalorder %s22, 2
      %s24 = scalar_select %p23, 0, %s22
      %s25 = sadd.s32 1, %s16
      %s26 = scalar_select %p23, %s25, %s16
      %p27 = scmp.ge.s32.totalorder %s26, 2
      %s28 = scalar_select %p27, 0, %s26
      %s29 = ssub.s32 %s16, %s28
      %s30 = ssub.s32 %s17, %s24
      %s31 = sor.u32 %s29, %s30
      %p32 = scmp.eq.s32.totalorder %s31, 0
      %s34 = sadd.s32 %s33, 1
      %s35 = scalar_select %p32, %s33, %s34
      %p38 = pneg %p32
      %p39 = scmp.eq.s32.totalorder %s9, 3
      %p40 = por %p38, %p39
      %p41 = scmp.ne.s32.totalorder %s33, %s36
      %p42 = scmp.eq.s32.totalorder %s9, 0
      %p43 = por %p41, %p42
      %p44 = scmp.ne.s32.totalorder %s33, %s36
      %p45 = scmp.eq.s32.totalorder %s14, 3
      %p46 = por %p44, %p45
      %p47 = scmp.ne.s32.totalorder %s36, %s37
      %p48 = scmp.eq.s32.totalorder %s14, 0
      %p49 = por %p47, %p48
      %p50 = scmp.ne.s32.totalorder %s36, %s37
      %p51 = scmp.eq.s32.totalorder %s15, 3
      %p52 = por %p50, %p51
      %p54 = scmp.ne.s32.totalorder %s37, %s53
      %p55 = scmp.eq.s32.totalorder %s15, 0
      %p56 = por %p54, %p55
      %s58 = sadd.s32 %s57, 1
      %p61 = scmp.eq.s32.totalorder %s9, 3
      %p62 = scmp.ne.s32.totalorder %s57, %s59
      %p63 = scmp.eq.s32.totalorder %s9, 0
      %p64 = por %p62, %p63
      %p65 = scmp.ne.s32.totalorder %s57, %s59
      %p66 = scmp.eq.s32.totalorder %s14, 3
      %p67 = por %p65, %p66
      %p68 = scmp.ne.s32.totalorder %s59, %s60
      %p69 = scmp.eq.s32.totalorder %s14, 0
      %p70 = por %p68, %p69
      %p71 = scmp.ne.s32.totalorder %s59, %s60
      %p72 = scmp.eq.s32.totalorder %s15, 3
      %p73 = por %p71, %p72
      %p75 = scmp.ne.s32.totalorder %s60, %s74
      %p76 = scmp.eq.s32.totalorder %s15, 0
      %p77 = por %p75, %p76
      %s79 = sadd.s32 %s78, 1
      %p82 = scmp.eq.s32.totalorder %s9, 3
      %p83 = scmp.ne.s32.totalorder %s78, %s80
      %p84 = scmp.eq.s32.totalorder %s9, 0
      %p85 = por %p83, %p84
      %p86 = scmp.ne.s32.totalorder %s78, %s80
      %p87 = scmp.eq.s32.totalorder %s14, 3
      %p88 = por %p86, %p87
      %p89 = scmp.ne.s32.totalorder %s80, %s81
      %p90 = scmp.eq.s32.totalorder %s14, 0
      %p91 = por %p89, %p90
      %p92 = scmp.ne.s32.totalorder %s80, %s81
      %p93 = scmp.eq.s32.totalorder %s15, 3
      %p94 = por %p92, %p93
      %p96 = scmp.ne.s32.totalorder %s81, %s95
      %p97 = scmp.eq.s32.totalorder %s15, 0
      %p98 = por %p96, %p97
      %s99 = ssub.s32 %s16, %s28
      %s100 = ssub.s32 %s17, %s24
      %s101 = sor.u32 %s99, %s100
      %p102 = scmp.eq.s32.totalorder %s101, 0
      %s104 = sadd.s32 %s103, 1
      %s105 = scalar_select %p102, %s103, %s104
      %p108 = pneg %p102
      %p109 = scmp.eq.s32.totalorder %s9, 3
      %p110 = por %p108, %p109
      %p111 = scmp.ne.s32.totalorder %s103, %s106
      %p112 = scmp.eq.s32.totalorder %s9, 0
      %p113 = por %p111, %p112
      %p114 = scmp.ne.s32.totalorder %s103, %s106
      %p115 = scmp.eq.s32.totalorder %s14, 3
      %p116 = por %p114, %p115
      %p117 = scmp.ne.s32.totalorder %s106, %s107
      %p118 = scmp.eq.s32.totalorder %s14, 0
      %p119 = por %p117, %p118
      %p120 = scmp.ne.s32.totalorder %s106, %s107
      %p121 = scmp.eq.s32.totalorder %s15, 3
      %p122 = por %p120, %p121
      %p124 = scmp.ne.s32.totalorder %s107, %s123
      %p125 = scmp.eq.s32.totalorder %s15, 0
      %p126 = por %p124, %p125
      %p127 = scmp.le.s32.totalorder 1, %s9
      %p128 = scmp.lt.s32.totalorder %s9, 5
      %p129 = pnand %p127, %p128
      %p130 = pneg %p129
      // Predicated region
      $region9: #{rrb_forward.3} parent=5 // pred_check
        _
      $region10: #{rrb_forward.3} parent=5 // pred_check_branch
        %132 = sbr.rel (%p129) target = $region12
      $region11: #{rrb_forward.3} parent=5 // pred_region
        %s133 = ssub.s32 %s9, 1
        // Predicated region
        $region13: #{rrb_forward.3} parent=11 // pred_check
          %p134 = pneg %p70
        $region14: #{rrb_forward.3} parent=11 // pred_check_branch
          %136 = sbr.rel (%p134) target = $region16
        $region15: #{rrb_forward.3} parent=11 // pred_region
          _
        $region16: #{rrb_forward.3} parent=11 // pred_fallthru
          _
        // Predicated region
        $region17: #{rrb_forward.3} parent=11 // pred_check
          %p137 = pneg %p91
        $region18: #{rrb_forward.3} parent=11 // pred_check_branch
          %139 = sbr.rel (%p137) target = $region20
        $region19: #{rrb_forward.3} parent=11 // pred_region
          _
        $region20: #{rrb_forward.3} parent=11 // pred_fallthru
          _
      $region12: #{rrb_forward.3} parent=5 // pred_fallthru
        _
      %p140 = scmp.lt.s32.totalorder %s9, 4
      // Predicated region
      $region21: #{rrb_forward.3} parent=5 // pred_check
        %p141 = pneg %p140
      $region22: #{rrb_forward.3} parent=5 // pred_check_branch
        %143 = sbr.rel (%p141) target = $region24
      $region23: #{rrb_forward.3} parent=5 // pred_region
        // Predicated region
        $region25: #{rrb_forward.3} parent=23 // pred_check
          %p144 = pneg %p43
        $region26: #{rrb_forward.3} parent=23 // pred_check_branch
          %146 = sbr.rel (%p144) target = $region28
        $region27: #{rrb_forward.3} parent=23 // pred_region
          %p147 = scmp.lt.s32.totalorder %s16, 1
          %s148 = scalar_select %p147, %s16, 1
          %p149 = scmp.lt.s32.totalorder %s17, 1
          %s150 = scalar_select %p149, %s17, 1
          %s151 = smul.addr %s148, 2
          %s152 = sadd.s32 %s150, %s151
          %s153 = smul.addr %s152, 4
          %s154 = scalar_lea.vmem %s0, %s153
        $region28: #{rrb_forward.3} parent=23 // pred_fallthru
          _
      $region24: #{rrb_forward.3} parent=5 // pred_fallthru
        _
      %p155 = scmp.le.s32.totalorder 1, %s9
      %p156 = scmp.lt.s32.totalorder %s9, 5
      %p157 = pnand %p155, %p156
      %p158 = pneg %p157
      // Predicated region
      $region29: #{rrb_forward.3} parent=5 // pred_check
        _
      $region30: #{rrb_forward.3} parent=5 // pred_check_branch
        %160 = sbr.rel (%p157) target = $region32
      $region31: #{rrb_forward.3} parent=5 // pred_region
        %s161 = ssub.s32 %s9, 1
        %p162 = scmp.lt.s32.totalorder %s18, 1
        %s163 = scalar_select %p162, %s18, 1
        %p164 = scmp.lt.s32.totalorder %s19, 1
        %s165 = scalar_select %p164, %s19, 1
        %s166 = smul.addr %s163, 2
        %s167 = sadd.s32 %s165, %s166
        %s168 = smul.addr %s167, 4
        %s169 = scalar_lea.vmem %s0, %s168
        %p170 = pneg %p49
        %p171 = pneg %p46
        %p172 = pneg %p70
        %p173 = pneg %p67
        %p174 = pneg %p91
        %p175 = pneg %p88
        %p176 = pneg %p119
        %p177 = pneg %p116
        %s178 = sand.u32 %s106, 1
        %s179 = sand.u32 %s106, 1
        %s180 = smul.addr %s179, 32
        %s181 = scalar_lea.vmem [#allocation2], %s180
        %p182 = scmp.lt.s32.totalorder %s18, 1
        %s183 = scalar_select %p182, %s18, 1
        %p184 = scmp.lt.s32.totalorder %s19, 1
        %s185 = scalar_select %p184, %s19, 1
        %s186 = smul.addr %s183, 2
        %s187 = sadd.s32 %s185, %s186
        %s188 = smul.addr %s187, 4
        %s189 = scalar_lea.vmem %s0, %s188
        %v190 = vld [vmem:[%s189] sm:$0xf]
        %v191 = vld [vmem:[%s1] sm:$0xff]
        %v192 = vld [vmem:[%s1 + $0x8] sm:$0xff]
        %v193 = vld [vmem:[%s1 + $0x10] sm:$0xff]
        %v194 = vld [vmem:[%s1 + $0x18] sm:$0xff]
        %196 = vset.pattern.permute.xlu0 0
        %197 = vperm.xlu0 %196, %v191
        %v198 = vpop.permute.xlu0 %197
        %201 = vset.pattern.permute.xlu0 0
        %202 = vperm.xlu0 %201, %v192
        %v203 = vpop.permute.xlu0 %202
        %206 = vset.pattern.permute.xlu0 0
        %207 = vperm.xlu0 %206, %v193
        %v208 = vpop.permute.xlu0 %207
        %211 = vset.pattern.permute.xlu0 0
        %212 = vperm.xlu0 %211, %v194
        %v213 = vpop.permute.xlu0 %212
        %v215 = vlaneseq
        %v216 = vshrl.u32 %v215, 7
        %v217 = vsub.s32 0, %v216
        %v218 = vrot.slane %v190, %v217
        %v219 = vmul.f32 %v198, %v218
        %v220 = vmul.f32 %v203, %v218
        %v221 = vmul.f32 %v208, %v218
        %v222 = vmul.f32 %v213, %v218
        %v223 = vld [vmem:[%s2] sm:$0xff]
        %v224 = vld [vmem:[%s2 + $0x8] sm:$0xff]
        %v225 = vld [vmem:[%s2 + $0x10] sm:$0xff]
        %v226 = vld [vmem:[%s2 + $0x18] sm:$0xff]
        %228 = vset.pattern.permute.xlu0 0
        %229 = vperm.xlu0 %228, %v223
        %v230 = vpop.permute.xlu0 %229
        %233 = vset.pattern.permute.xlu0 0
        %234 = vperm.xlu0 %233, %v224
        %v235 = vpop.permute.xlu0 %234
        %238 = vset.pattern.permute.xlu0 0
        %239 = vperm.xlu0 %238, %v225
        %v240 = vpop.permute.xlu0 %239
        %243 = vset.pattern.permute.xlu0 0
        %244 = vperm.xlu0 %243, %v226
        %v245 = vpop.permute.xlu0 %244
        %v247 = vadd.f32 %v219, %v230
        %v248 = vadd.f32 %v220, %v235
        %v249 = vadd.f32 %v221, %v240
        %v250 = vadd.f32 %v222, %v245
        %251 = vset.pattern.permute.xlu0 1
        %252 = vperm.xlu0 %251, %v191
        %v253 = vpop.permute.xlu0 %252
        %255 = vset.pattern.permute.xlu0 1
        %256 = vperm.xlu0 %255, %v192
        %v257 = vpop.permute.xlu0 %256
        %259 = vset.pattern.permute.xlu0 1
        %260 = vperm.xlu0 %259, %v193
        %v261 = vpop.permute.xlu0 %260
        %263 = vset.pattern.permute.xlu0 1
        %264 = vperm.xlu0 %263, %v194
        %v265 = vpop.permute.xlu0 %264
        %v267 = vlaneseq
        %v268 = vshrl.u32 %v267, 7
        %v269 = vsub.s32 1, %v268
        %v270 = vrot.slane %v190, %v269
        %v271 = vmul.f32 %v253, %v270
        %v272 = vmul.f32 %v257, %v270
        %v273 = vmul.f32 %v261, %v270
        %v274 = vmul.f32 %v265, %v270
        %v275 = vadd.f32 %v247, %v271
        %v276 = vadd.f32 %v248, %v272
        %v277 = vadd.f32 %v249, %v273
        %v278 = vadd.f32 %v250, %v274
        %279 = vset.pattern.permute.xlu0 2
        %280 = vperm.xlu0 %279, %v191
        %v281 = vpop.permute.xlu0 %280
        %283 = vset.pattern.permute.xlu0 2
        %284 = vperm.xlu0 %283, %v192
        %v285 = vpop.permute.xlu0 %284
        %287 = vset.pattern.permute.xlu0 2
        %288 = vperm.xlu0 %287, %v193
        %v289 = vpop.permute.xlu0 %288
        %291 = vset.pattern.permute.xlu0 2
        %292 = vperm.xlu0 %291, %v194
        %v293 = vpop.permute.xlu0 %292
        %v295 = vlaneseq
        %v296 = vshrl.u32 %v295, 7
        %v297 = vsub.s32 2, %v296
        %v298 = vrot.slane %v190, %v297
        %v299 = vmul.f32 %v281, %v298
        %v300 = vmul.f32 %v285, %v298
        %v301 = vmul.f32 %v289, %v298
        %v302 = vmul.f32 %v293, %v298
        %v303 = vadd.f32 %v275, %v299
        %v304 = vadd.f32 %v276, %v300
        %v305 = vadd.f32 %v277, %v301
        %v306 = vadd.f32 %v278, %v302
        %307 = vset.pattern.permute.xlu0 3
        %308 = vperm.xlu0 %307, %v191
        %v309 = vpop.permute.xlu0 %308
        %311 = vset.pattern.permute.xlu0 3
        %312 = vperm.xlu0 %311, %v192
        %v313 = vpop.permute.xlu0 %312
        %315 = vset.pattern.permute.xlu0 3
        %316 = vperm.xlu0 %315, %v193
        %v317 = vpop.permute.xlu0 %316
        %319 = vset.pattern.permute.xlu0 3
        %320 = vperm.xlu0 %319, %v194
        %v321 = vpop.permute.xlu0 %320
        %v323 = vlaneseq
        %v324 = vshrl.u32 %v323, 7
        %v325 = vsub.s32 3, %v324
        %v326 = vrot.slane %v190, %v325
        %v327 = vmul.f32 %v309, %v326
        %v328 = vmul.f32 %v313, %v326
        %v329 = vmul.f32 %v317, %v326
        %v330 = vmul.f32 %v321, %v326
        %v331 = vadd.f32 %v303, %v327
        %v332 = vadd.f32 %v304, %v328
        %v333 = vadd.f32 %v305, %v329
        %v334 = vadd.f32 %v306, %v330
        %335 = vst [vmem:[%s181] sm:$0xff] %v331
        %336 = vst [vmem:[%s181 + $0x8] sm:$0xff] %v332
        %337 = vst [vmem:[%s181 + $0x10] sm:$0xff] %v333
        %338 = vst [vmem:[%s181 + $0x18] sm:$0xff] %v334
        %s339 = sand.u32 %s106, 1
        %s340 = sand.u32 %s106, 1
        %s341 = smul.addr %s340, 32
        %s342 = scalar_lea.vmem [#allocation2], %s341
        // Predicated region
        $region33: #{rrb_forward.3} parent=31 // pred_check
          %p343 = pneg %p116
        $region34: #{rrb_forward.3} parent=31 // pred_check_branch
          %345 = sbr.rel (%p343) target = $region36
        $region35: #{rrb_forward.3} parent=31 // pred_region
          %s346 = smul.addr %s18, 8
          %s347 = sadd.s32 %s19, %s346
          %s348 = smul.addr %s347, 8
          %s349 = scalar_lea.vmem %s3, %s348
          // Predicated region
          $region37: #{rrb_forward.3} parent=35 // pred_check
            _
          $region38: #{rrb_forward.3} parent=35 // pred_check_branch
            %351 = sbr.rel (0) target = $region40
          $region39: #{rrb_forward.3} parent=35 // pred_region
            // Predicated region
            $region41: #{rrb_forward.3} parent=39 // pred_check
              _
            $region42: #{rrb_forward.3} parent=39 // pred_check_branch
              %353 = sbr.rel (0) target = $region44
            $region43: #{rrb_forward.3} parent=39 // pred_region
              // Predicated region
              $region56: #{rrb_forward.3} parent=43 // pred_check
                _
              $region57: #{rrb_forward.3} parent=43 // pred_check_branch
                %374 = sbr.rel (0) target = $region59
              $region58: #{rrb_forward.3} parent=43 // pred_region
                loop: start=0, step=1, limit=1
                $region60: #{rrb_forward.3} parent=58 // loop_pre_header
                  _
                $region61: #{rrb_forward.3} parent=58 // loop_header
                  %s376 = sphi 0, %s380
                  %p377 = scmp.ge.s32.totalorder %s376, 1
                  %s381 = sphi %s342, %s342
                  %s382 = sphi %s349, %s349
                $region62: #{rrb_forward.3} parent=58 // loop_header_branch
                  %379 = sbr.rel (%p377) target = $region66
                $region63: #{rrb_forward.3} parent=58 // loop_body
                  %v383 = vld [vmem:[%s381] sm:$0xff]
                  %384 = vst [vmem:[%s382] sm:$0xff] %v383
                  %v385 = vld [vmem:[%s381 + $0x8] sm:$0xff]
                  %386 = vst [vmem:[%s382 + $0x10] sm:$0xff] %v385
                  %v387 = vld [vmem:[%s381 + $0x10] sm:$0xff]
                  %388 = vst [vmem:[%s382 + $0x20] sm:$0xff] %v387
                  %v389 = vld [vmem:[%s381 + $0x18] sm:$0xff]
                  %390 = vst [vmem:[%s382 + $0x30] sm:$0xff] %v389
                $region64: #{rrb_forward.3} parent=58 // loop_footer
                  %s380 = sadd.s32 1, %s376
                $region65: #{rrb_forward.3} parent=58 // loop_footer_branch
                  %375 = sbr.rel target = $region61
                $region66: #{rrb_forward.3} parent=58 // loop_exit
                  _
              $region59: #{rrb_forward.3} parent=43 // pred_fallthru
                _
              // Predicated region
              $region67: #{rrb_forward.3} parent=43 // pred_check
                _
              $region68: #{rrb_forward.3} parent=43 // pred_check_branch
                %392 = sbr.rel target = $region70
              $region69: #{rrb_forward.3} parent=43 // pred_region
                _
              $region70: #{rrb_forward.3} parent=43 // pred_fallthru
                _
            $region44: #{rrb_forward.3} parent=39 // pred_fallthru
              _
            // Predicated region
            $region45: #{rrb_forward.3} parent=39 // pred_check
              _
            $region46: #{rrb_forward.3} parent=39 // pred_check_branch
              %355 = sbr.rel target = $region48
            $region47: #{rrb_forward.3} parent=39 // pred_region
              loop: start=0, step=1, limit=1
              $region49: #{rrb_forward.3} parent=47 // loop_pre_header
                _
              $region50: #{rrb_forward.3} parent=47 // loop_header
                %s358 = sphi 0, %s362
                %p359 = scmp.ge.s32.totalorder %s358, 1
                %s363 = sphi %s342, %s342
                %s364 = sphi %s349, %s349
              $region51: #{rrb_forward.3} parent=47 // loop_header_branch
                %361 = sbr.rel (%p359) target = $region55
              $region52: #{rrb_forward.3} parent=47 // loop_body
                %v365 = vld [vmem:[%s363] sm:$0xff]
                %366 = vst [vmem:[%s364] sm:$0xff] %v365
                %v367 = vld [vmem:[%s363 + $0x8] sm:$0xff]
                %368 = vst [vmem:[%s364 + $0x10] sm:$0xff] %v367
                %v369 = vld [vmem:[%s363 + $0x10] sm:$0xff]
                %370 = vst [vmem:[%s364 + $0x20] sm:$0xff] %v369
                %v371 = vld [vmem:[%s363 + $0x18] sm:$0xff]
                %372 = vst [vmem:[%s364 + $0x30] sm:$0xff] %v371
              $region53: #{rrb_forward.3} parent=47 // loop_footer
                %s362 = sadd.s32 1, %s358
              $region54: #{rrb_forward.3} parent=47 // loop_footer_branch
                %357 = sbr.rel target = $region50
              $region55: #{rrb_forward.3} parent=47 // loop_exit
                _
            $region48: #{rrb_forward.3} parent=39 // pred_fallthru
              _
          $region40: #{rrb_forward.3} parent=35 // pred_fallthru
            _
          %393 = vnop
        $region36: #{rrb_forward.3} parent=31 // pred_fallthru
          _
      $region32: #{rrb_forward.3} parent=5 // pred_fallthru
        _
      %p394 = scmp.le.s32.totalorder 2, %s9
      // Predicated region
      $region71: #{rrb_forward.3} parent=5 // pred_check
        %p395 = pneg %p394
      $region72: #{rrb_forward.3} parent=5 // pred_check_branch
        %397 = sbr.rel (%p395) target = $region74
      $region73: #{rrb_forward.3} parent=5 // pred_region
        %s398 = ssub.s32 %s9, 2
        // Predicated region
        $region75: #{rrb_forward.3} parent=73 // pred_check
          %p399 = pneg %p122
        $region76: #{rrb_forward.3} parent=73 // pred_check_branch
          %401 = sbr.rel (%p399) target = $region78
        $region77: #{rrb_forward.3} parent=73 // pred_region
          %s402 = sand.u32 %s107, 1
          %s403 = sand.u32 %s107, 1
          %s404 = smul.addr %s403, 32
          %s405 = scalar_lea.vmem [#allocation2], %s404
        $region78: #{rrb_forward.3} parent=73 // pred_fallthru
          _
      $region74: #{rrb_forward.3} parent=5 // pred_fallthru
        _
    $region6: #{rrb_forward.3} parent=1 // loop_footer
      %s13 = sadd.s32 1, %s9
    $region7: #{rrb_forward.3} parent=1 // loop_footer_branch
      %8 = sbr.rel target = $region3
    $region8: #{rrb_forward.3} parent=1 // loop_exit
      _

</llo_original>
